<compile_context>
chip_gen: v7x
topology: tpu7x:2x2x1
jax: 0.10.0
libtpu: 0.0.40
codegen_flags: <defaults>
</compile_context>

<pallas_src>
import jax
import jax.numpy as jnp
from jax.experimental import pallas as pl
from jax.experimental.pallas import tpu as pltpu


# ----------------------------------------------------------------------------
# Kernels
# ----------------------------------------------------------------------------
def _make_kernel(n_classes):
    if n_classes == 1:
        def kernel(x_ref, w1_ref, b1_ref, w2_ref, b2_ref, a_ref):
            # Layer 1 on the MXU, f32 accumulation; bias + tanh in f32.
            h = jnp.dot(x_ref[...], w1_ref[...],
                        preferred_element_type=jnp.float32)        # (TN, D)
            h = jnp.tanh(h + b1_ref[...])
            # Layer 2 (C == 1): broadcast-mul by the single class row of W2
            # (torch [out, in] layout -> (1, D)) and lane-reduce over D on the
            # VPU/XLU; the MXU would be mostly padding for a 1-wide RHS.
            w2 = w2_ref[...].astype(jnp.float32)                   # (1, D)
            a = jnp.sum(h * w2, axis=-1, keepdims=True)            # (TN, 1)
            a_ref[...] = (a + b2_ref[...]).astype(a_ref.dtype)
    else:
        def kernel(x_ref, w1_ref, b1_ref, w2_ref, b2_ref, a_ref):
            h = jnp.dot(x_ref[...], w1_ref[...],
                        preferred_element_type=jnp.float32)        # (TN, D)
            h = jnp.tanh(h + b1_ref[...])
            # Layer 2 (C > 1): one padded MXU pass; the MXU is idle after
            # layer 1 so this is effectively free and avoids C VPU passes.
            a = jnp.dot(h, w2_ref[...].astype(jnp.float32),
                        preferred_element_type=jnp.float32)        # (TN, C)
            a_ref[...] = (a + b2_ref[...]).astype(a_ref.dtype)
    return kernel


# ----------------------------------------------------------------------------
# Tiling / VMEM budgeting
# ----------------------------------------------------------------------------
def _round_up(v, m):
    return -(-v // m) * m


def _tpu_config():
    """(VMEM budget for tile sizing, vmem_limit cap, #TensorCores per chip)."""
    try:
        kind = jax.devices()[0].device_kind.lower()
    except Exception:  # no device info available: be conservative (v7x-safe)
        kind = ""
    if "v7" in kind:
        # 64 MiB physical VMEM per TensorCore -> leave headroom for scratch.
        return 40 * 2**20, 48 * 2**20, 2
    if "v4" in kind or "v5p" in kind:
        return 80 * 2**20, 100 * 2**20, 2
    # v5e / v6e: 128 MiB physical, single TensorCore.
    return 80 * 2**20, 100 * 2**20, 1


def _footprint_bytes(tile_n, l, d, c, itemsize):
    """Double-buffered VMEM footprint of one grid step (lane/sublane padded)."""
    t8 = _round_up(max(tile_n, 1), 8)
    l_pad, d_pad, c_pad = _round_up(l, 128), _round_up(d, 128), _round_up(c, 128)
    x_buf = 2 * t8 * l_pad * itemsize          # double-buffered x tile
    out_buf = 2 * t8 * c_pad * 4               # (TN, C) block is 128-lane padded
    h_tmp = 2 * t8 * d_pad * 4                 # f32 hidden + elementwise temps
    w_buf = (2 * (_round_up(l, 8) * d_pad + _round_up(max(c, 8), 8) * d_pad) * itemsize
             + 2 * (8 * d_pad + 8 * c_pad) * 4)
    return x_buf + out_buf + h_tmp + w_buf


def _pick_tile_n(n, l, d, c, itemsize, vmem_budget, num_tc):
    """Byte-driven row tile: ~4 MiB of x per tile (>= 512 rows, MXU aligned),
    shrunk until the full double-buffered footprint fits the VMEM budget."""
    l_pad = _round_up(l, 128)
    tile = _round_up(max((4 << 20) // max(l_pad * itemsize, 1), 512), 128)
    while tile > 8 and _footprint_bytes(tile, l, d, c, itemsize) > vmem_budget:
        tile = max(tile // 2, 8)
    if n <= tile:
        # Whole bag in one grid step: grid steps are a serial loop on a single
        # TensorCore, so extra steps are pure overhead.  Only split in two on
        # dual-TC chips and only when each half keeps >= 512 rows.
        if num_tc >= 2 and n >= 1024:
            return _round_up(-(-n // 2), 8)
        return n
    return tile


# ----------------------------------------------------------------------------
# Wrapper
# ----------------------------------------------------------------------------
def attn_net_forward(x, w1, b1, w2, b2, *, tile_n=None):
    """Pallas implementation of Attn_Net.forward.

    x : (N, L)
    w1: (L, D), b1: (D,)   -- first nn.Linear (weight stored as [in, out])
    w2: (D, C), b2: (C,)   -- second nn.Linear (weight stored as [in, out])
    Returns (A, x) with A of shape (N, C), matching the PyTorch module.
    """
    N, L = x.shape
    Lw, D = w1.shape
    Dw, C = w2.shape
    assert Lw == L and Dw == D, "weight shapes must be [L,D] and [D,C]"

    budget, limit_cap, num_tc = _tpu_config()
    itemsize = x.dtype.itemsize
    if tile_n is None:
        tile_n = _pick_tile_n(N, L, D, C, itemsize, budget, num_tc)
    grid = (pl.cdiv(N, tile_n),)

    b1_2d = b1.reshape(1, D).astype(jnp.float32)
    b2_2d = b2.reshape(1, C).astype(jnp.float32)
    if C == 1:
        w2_in = jnp.transpose(w2)          # (1, D): torch [out, in] -> VPU path
        w2_block = (1, D)
    else:
        w2_in = w2                         # (D, C): plain MXU RHS
        w2_block = (D, C)

    fp = _footprint_bytes(tile_n, L, D, C, itemsize)
    vmem_limit = int(min(max(int(fp * 1.25) + (4 << 20), 32 << 20), limit_cap))

    cost = pl.CostEstimate(
        flops=2 * N * L * D + 2 * N * D * C,
        transcendentals=N * D,
        bytes_accessed=(N * L * itemsize + N * C * itemsize
                        + L * D * w1.dtype.itemsize + D * C * w2.dtype.itemsize
                        + (D + C) * 4),
    )

    a = pl.pallas_call(
        _make_kernel(C),
        out_shape=jax.ShapeDtypeStruct((N, C), x.dtype),
        grid_spec=pltpu.PrefetchScalarGridSpec(
            num_scalar_prefetch=0,
            grid=grid,
            in_specs=[
                pl.BlockSpec((tile_n, L), lambda i: (i, 0)),   # x tile
                pl.BlockSpec((L, D), lambda i: (0, 0)),        # W1 (constant block)
                pl.BlockSpec((1, D), lambda i: (0, 0)),        # b1
                pl.BlockSpec(w2_block, lambda i: (0, 0)),      # W2
                pl.BlockSpec((1, C), lambda i: (0, 0)),        # b2
            ],
            out_specs=pl.BlockSpec((tile_n, C), lambda i: (i, 0)),
        ),
        compiler_params=pltpu.CompilerParams(
            dimension_semantics=("parallel",),
            vmem_limit_bytes=vmem_limit,
        ),
        cost_estimate=cost,
    )(x, w1, b1_2d, w2_in, b2_2d)

    # The module returns the attention scores AND the untouched input features.
    return a, x


def init_params(key, L, D, C, dtype=jnp.float32):
    """Deterministic synthetic params (shapes match nn.Linear(L,D), nn.Linear(D,C))."""
    k1, k2, k3, k4 = jax.random.split(key, 4)
    w1 = jax.random.uniform(k1, (L, D), dtype, -1.0, 1.0) / jnp.sqrt(L).astype(dtype)
    b1 = jax.random.uniform(k2, (D,), dtype, -1.0, 1.0) / jnp.sqrt(L).astype(dtype)
    w2 = jax.random.uniform(k3, (D, C), dtype, -1.0, 1.0) / jnp.sqrt(D).astype(dtype)
    b2 = jax.random.uniform(k4, (C,), dtype, -1.0, 1.0) / jnp.sqrt(D).astype(dtype)
    return w1, b1, w2, b2


# TODO(synk): train-mode nn.Dropout(0.25) (dropout=True) is not implemented;
# at inference it is an identity, which is what this forward reproduces.

if __name__ == "__main__":
    # Small shapes consistent with Attn_Net(L, D, n_classes): a bag of N
    # instances of dimension L.  N is deliberately not tile/8 aligned.
    N, L, D = 300, 128, 64
    key = jax.random.PRNGKey(0)
    kx, kp = jax.random.split(key)
    x = jax.random.normal(kx, (N, L), dtype=jnp.float32)

    # --- n_classes = 1 (VPU second layer), auto tile -> single grid step -----
    w1, b1, w2, b2 = init_params(kp, L, D, 1)
    a, x_out = attn_net_forward(x, w1, b1, w2, b2)
    jax.block_until_ready((a, x_out))

    a_ref = jnp.tanh(x @ w1 + b1) @ w2 + b2
    assert a.shape == (N, 1)
    assert x_out.shape == (N, L)
    assert jnp.allclose(a, a_ref, atol=1e-4, rtol=1e-4)
    assert jnp.array_equal(x_out, x)

    # --- forced small tile: multi-step grid with a masked partial last block -
    a_tiled, _ = attn_net_forward(x, w1, b1, w2, b2, tile_n=128)
    jax.block_until_ready(a_tiled)
    assert jnp.allclose(a_tiled, a_ref, atol=1e-4, rtol=1e-4)

    # --- n_classes > 1 (MXU second layer) ------------------------------------
    w1b, b1b, w2b, b2b = init_params(jax.random.PRNGKey(1), L, D, 3)
    a3, _ = attn_net_forward(x, w1b, b1b, w2b, b2b)
    jax.block_until_ready(a3)
    a3_ref = jnp.tanh(x @ w1b + b1b) @ w2b + b2b
    assert a3.shape == (N, 3)
    assert jnp.allclose(a3, a3_ref, atol=1e-4, rtol=1e-4)

    print("KERNEL_OK")
</pallas_src>

<mosaic_0001>
module attributes {stable_mosaic.version = 11 : i64} {
  func.func @kernel(%arg0: i32, %arg1: memref<300x128xf32, #tpu.memory_space<vmem>>, %arg2: memref<128x64xf32, #tpu.memory_space<vmem>>, %arg3: memref<1x64xf32, #tpu.memory_space<vmem>>, %arg4: memref<1x64xf32, #tpu.memory_space<vmem>>, %arg5: memref<1x1xf32, #tpu.memory_space<vmem>>, %arg6: memref<300x1xf32, #tpu.memory_space<vmem>>) attributes {dimension_semantics = [#tpu.dimension_semantics<parallel>], iteration_bounds = array<i64: 1>, scalar_prefetch = 0 : i64, scratch_operands = 0 : i64, tpu.core_type = #tpu.core_type<tc>, window_params = [{transform_indices = @transform_0, window_bounds = array<i64: 300, 128>}, {pipeline_mode = #tpu.pipeline_mode<synchronous>, transform_indices = @transform_1, window_bounds = array<i64: 128, 64>}, {pipeline_mode = #tpu.pipeline_mode<synchronous>, transform_indices = @transform_2, window_bounds = array<i64: 1, 64>}, {pipeline_mode = #tpu.pipeline_mode<synchronous>, transform_indices = @transform_3, window_bounds = array<i64: 1, 64>}, {pipeline_mode = #tpu.pipeline_mode<synchronous>, transform_indices = @transform_4, window_bounds = array<i64: 1, 1>}, {transform_indices = @transform_5, window_bounds = array<i64: 300, 1>}]} {
    %c0 = arith.constant 0 : index
    %c0_0 = arith.constant 0 : index
    %0 = vector.load %arg1[%c0, %c0_0] : memref<300x128xf32, #tpu.memory_space<vmem>>, vector<300x128xf32>
    %c0_1 = arith.constant 0 : index
    %c0_2 = arith.constant 0 : index
    %1 = vector.load %arg2[%c0_1, %c0_2] : memref<128x64xf32, #tpu.memory_space<vmem>>, vector<128x64xf32>
    %cst = arith.constant dense<0.000000e+00> : vector<300x64xf32>
    %2 = tpu.matmul %0, %1, %cst {dimension_numbers = #tpu.dot_dimension_numbers<[1], [0], [0], [1], [0, 0, 1, 1], [], []>} : vector<300x128xf32>, vector<128x64xf32>, vector<300x64xf32> -> vector<300x64xf32>
    %c0_3 = arith.constant 0 : index
    %c0_4 = arith.constant 0 : index
    %3 = vector.load %arg3[%c0_3, %c0_4] : memref<1x64xf32, #tpu.memory_space<vmem>>, vector<1x64xf32>
    %4 = vector.broadcast %3 : vector<1x64xf32> to vector<300x64xf32>
    %5 = arith.addf %2, %4 : vector<300x64xf32>
    %6 = math.tanh %5 : vector<300x64xf32>
    %c0_5 = arith.constant 0 : index
    %c0_6 = arith.constant 0 : index
    %7 = vector.load %arg4[%c0_5, %c0_6] : memref<1x64xf32, #tpu.memory_space<vmem>>, vector<1x64xf32>
    %8 = vector.broadcast %7 : vector<1x64xf32> to vector<300x64xf32>
    %9 = arith.mulf %6, %8 : vector<300x64xf32>
    %cst_7 = arith.constant dense<0.000000e+00> : vector<300xf32>
    %10 = vector.multi_reduction <add>, %9, %cst_7 [1] : vector<300x64xf32> to vector<300xf32>
    %11 = vector.shape_cast %10 : vector<300xf32> to vector<300x1xf32>
    %c0_8 = arith.constant 0 : index
    %c0_9 = arith.constant 0 : index
    %12 = vector.load %arg5[%c0_8, %c0_9] : memref<1x1xf32, #tpu.memory_space<vmem>>, vector<1x1xf32>
    %13 = vector.broadcast %12 : vector<1x1xf32> to vector<300x1xf32>
    %14 = arith.addf %11, %13 : vector<300x1xf32>
    %c0_10 = arith.constant 0 : index
    %c0_11 = arith.constant 0 : index
    %15 = vector.load %arg6[%c0_10, %c0_11] : memref<300x1xf32, #tpu.memory_space<vmem>>, vector<300x1xf32>
    tpu.vector_store %arg6[%c0_10, %c0_11], %14 {strides = array<i32>} : memref<300x1xf32, #tpu.memory_space<vmem>>, vector<300x1xf32>,
    return
  }
  func.func @transform_0(%arg0: i32) -> (i32, i32) {
    %c0_i32 = arith.constant 0 : i32
    %c0_i32_0 = arith.constant 0 : i32
    return %arg0, %c0_i32 : i32, i32
  }
  func.func @transform_1(%arg0: i32) -> (i32, i32) {
    %c0_i32 = arith.constant 0 : i32
    %c0_i32_0 = arith.constant 0 : i32
    %c0_i32_1 = arith.constant 0 : i32
    return %c0_i32, %c0_i32_0 : i32, i32
  }
  func.func @transform_2(%arg0: i32) -> (i32, i32) {
    %c0_i32 = arith.constant 0 : i32
    %c0_i32_0 = arith.constant 0 : i32
    %c0_i32_1 = arith.constant 0 : i32
    return %c0_i32, %c0_i32_0 : i32, i32
  }
  func.func @transform_3(%arg0: i32) -> (i32, i32) {
    %c0_i32 = arith.constant 0 : i32
    %c0_i32_0 = arith.constant 0 : i32
    %c0_i32_1 = arith.constant 0 : i32
    return %c0_i32, %c0_i32_0 : i32, i32
  }
  func.func @transform_4(%arg0: i32) -> (i32, i32) {
    %c0_i32 = arith.constant 0 : i32
    %c0_i32_0 = arith.constant 0 : i32
    %c0_i32_1 = arith.constant 0 : i32
    return %c0_i32, %c0_i32_0 : i32, i32
  }
  func.func @transform_5(%arg0: i32) -> (i32, i32) {
    %c0_i32 = arith.constant 0 : i32
    %c0_i32_0 = arith.constant 0 : i32
    return %arg0, %c0_i32 : i32, i32
  }
}

</mosaic_0001>

<llo_original>
// kernel: tpu_custom_call.1
$region0: #{tpu_custom_call.1}
  #allocation0 [shape = 'u32[]', space=smem, size = 0x4, offset = 0x4, fixed_abs, tag = 'smem constant byte address 0x4 - core index']
  #allocation1 [shape = 'u32[144,128]{1,0:T(1,128)}', space=vmem, size = 0x12000, scoped, tag = 'internal scratch']
  #allocation2 [shape = 'f32[1,1]{1,0:T(1,128)S(1)}', space=vmem, size = 0x200, scoped, tag = 'scoped memory for tpu_custom_call.1']
  %s0 = inlined_call_operand.hbm [shape: f32[300,128], index: 0, kind: input, shape index: {}]
  %s1 = inlined_call_operand.vmem [shape: f32[128,64], index: 1, kind: input, shape index: {}]
  %s2 = inlined_call_operand.vmem [shape: f32[1,64], index: 2, kind: input, shape index: {}]
  %s3 = inlined_call_operand.vmem [shape: f32[1,64], index: 3, kind: input, shape index: {}]
  %s4 = inlined_call_operand.<no memory space> [shape: f32[1,1], index: 4, kind: input, shape index: {}]
  %s5 = inlined_call_operand.vmem [shape: f32[300,1], index: 5, kind: output, shape index: {}]
  %s6 = sld [smem:[#allocation0]]
  $region34: #{tpu_custom_call.1} parent=0
    _
  %s8 = ssub.s32 1, %s6
  %s9 = scalar_select 0, %s8, %s6
  %v10 = vstv %s4
  %11 = vst [vmem:[#allocation2] sm:$0x1] %v10
  $region1: #{tpu_custom_call.1} parent=0
    #allocation3 [shape = 'u8[155648]{0}', space=vmem, size = 0x26000, scoped, tag = 'input window, operand 0, single buffered']
    #allocation4 [shape = 's32[1]{0}', space=sflag, size = 0x4, scoped, tag = 'scoped memory for tpu_custom_call.1']
    %12 = vsyncpa [#allocation4], 0
    // Predicated region
    $region2: #{tpu_custom_call.1} parent=1 // pred_check
      _
    $region3: #{tpu_custom_call.1} parent=1 // pred_check_branch
      %14 = sbr.rel (0) target = $region5
    $region4: #{tpu_custom_call.1} parent=1 // pred_region
      %s16 = ssub.s32 4864, 4864
      %17 = vsyncadd [#allocation4], %s16
      %s18 = sshll.u32 [#allocation3], 4
      %s19 = int_to_ptr.vmem [resolvable:$true] %s18
      %24 = dma.hbm_to_vmem [thread:$0]  %s0, 4864, %s19, [#allocation4], 128, 128, 8
    $region5: #{tpu_custom_call.1} parent=1 // pred_fallthru
      _
    // Predicated region
    $region6: #{tpu_custom_call.1} parent=1 // pred_check
      _
    $region7: #{tpu_custom_call.1} parent=1 // pred_check_branch
      %26 = sbr.rel (0) target = $region9
    $region8: #{tpu_custom_call.1} parent=1 // pred_region
      _
    $region9: #{tpu_custom_call.1} parent=1 // pred_fallthru
      _
    // Predicated region
    $region10: #{tpu_custom_call.1} parent=1 // pred_check
      _
    $region11: #{tpu_custom_call.1} parent=1 // pred_check_branch
      %28 = sbr.rel (0) target = $region13
    $region12: #{tpu_custom_call.1} parent=1 // pred_region
      _
    $region13: #{tpu_custom_call.1} parent=1 // pred_fallthru
      _
    // Predicated region
    $region14: #{tpu_custom_call.1} parent=1 // pred_check
      _
    $region15: #{tpu_custom_call.1} parent=1 // pred_check_branch
      %30 = sbr.rel (0) target = $region17
    $region16: #{tpu_custom_call.1} parent=1 // pred_region
      _
    $region17: #{tpu_custom_call.1} parent=1 // pred_fallthru
      _
    // Predicated region
    $region18: #{tpu_custom_call.1} parent=1 // pred_check
      _
    $region19: #{tpu_custom_call.1} parent=1 // pred_check_branch
      %32 = sbr.rel (0) target = $region21
    $region20: #{tpu_custom_call.1} parent=1 // pred_region
      _
    $region21: #{tpu_custom_call.1} parent=1 // pred_fallthru
      _
    // Predicated region
    $region22: #{tpu_custom_call.1} parent=1 // pred_check
      _
    $region23: #{tpu_custom_call.1} parent=1 // pred_check_branch
      %34 = sbr.rel (0) target = $region25
    $region24: #{tpu_custom_call.1} parent=1 // pred_region
      %35 = dma.done [#allocation4], 4864
    $region25: #{tpu_custom_call.1} parent=1 // pred_fallthru
      _
    %v36 = vld [vmem:[#allocation3] sm:$0xff]
    %v37 = vld [vmem:[#allocation3 + $0x8] sm:$0xff]
    %v38 = vld [vmem:[#allocation3 + $0x10] sm:$0xff]
    %v39 = vld [vmem:[#allocation3 + $0x18] sm:$0xff]
    %v40 = vld [vmem:[#allocation3 + $0x20] sm:$0xff]
    %v41 = vld [vmem:[#allocation3 + $0x28] sm:$0xff]
    %v42 = vld [vmem:[#allocation3 + $0x30] sm:$0xff]
    %v43 = vld [vmem:[#allocation3 + $0x38] sm:$0xff]
    %v44 = vld [vmem:[#allocation3 + $0x40] sm:$0xff]
    %v45 = vld [vmem:[#allocation3 + $0x48] sm:$0xff]
    %v46 = vld [vmem:[#allocation3 + $0x50] sm:$0xff]
    %v47 = vld [vmem:[#allocation3 + $0x58] sm:$0xff]
    %v48 = vld [vmem:[#allocation3 + $0x60] sm:$0xff]
    %v49 = vld [vmem:[#allocation3 + $0x68] sm:$0xff]
    %v50 = vld [vmem:[#allocation3 + $0x70] sm:$0xff]
    %v51 = vld [vmem:[#allocation3 + $0x78] sm:$0xff]
    %v52 = vld [vmem:[#allocation3 + $0x80] sm:$0xff]
    %v53 = vld [vmem:[#allocation3 + $0x88] sm:$0xff]
    %v54 = vld [vmem:[#allocation3 + $0x90] sm:$0xff]
    %v55 = vld [vmem:[#allocation3 + $0x98] sm:$0xff]
    %v56 = vld [vmem:[#allocation3 + $0xa0] sm:$0xff]
    %v57 = vld [vmem:[#allocation3 + $0xa8] sm:$0xff]
    %v58 = vld [vmem:[#allocation3 + $0xb0] sm:$0xff]
    %v59 = vld [vmem:[#allocation3 + $0xb8] sm:$0xff]
    %v60 = vld [vmem:[#allocation3 + $0xc0] sm:$0xff]
    %v61 = vld [vmem:[#allocation3 + $0xc8] sm:$0xff]
    %v62 = vld [vmem:[#allocation3 + $0xd0] sm:$0xff]
    %v63 = vld [vmem:[#allocation3 + $0xd8] sm:$0xff]
    %v64 = vld [vmem:[#allocation3 + $0xe0] sm:$0xff]
    %v65 = vld [vmem:[#allocation3 + $0xe8] sm:$0xff]
    %v66 = vld [vmem:[#allocation3 + $0xf0] sm:$0xff]
    %v67 = vld [vmem:[#allocation3 + $0xf8] sm:$0xff]
    %v68 = vld [vmem:[#allocation3 + $0x100] sm:$0xff]
    %v69 = vld [vmem:[#allocation3 + $0x108] sm:$0xff]
    %v70 = vld [vmem:[#allocation3 + $0x110] sm:$0xff]
    %v71 = vld [vmem:[#allocation3 + $0x118] sm:$0xff]
    %v72 = vld [vmem:[#allocation3 + $0x120] sm:$0xff]
    %v73 = vld [vmem:[#allocation3 + $0x128] sm:$0xf]
    %v74 = vld [vmem:[%s1] sm:$0xff]
    %v75 = vld [vmem:[%s1 + $0x8] sm:$0xff]
    %v76 = vld [vmem:[%s1 + $0x10] sm:$0xff]
    %v77 = vld [vmem:[%s1 + $0x18] sm:$0xff]
    %v78 = vld [vmem:[%s1 + $0x20] sm:$0xff]
    %v79 = vld [vmem:[%s1 + $0x28] sm:$0xff]
    %v80 = vld [vmem:[%s1 + $0x30] sm:$0xff]
    %v81 = vld [vmem:[%s1 + $0x38] sm:$0xff]
    %v82 = vld [vmem:[%s1 + $0x40] sm:$0xff]
    %v83 = vld [vmem:[%s1 + $0x48] sm:$0xff]
    %v84 = vld [vmem:[%s1 + $0x50] sm:$0xff]
    %v85 = vld [vmem:[%s1 + $0x58] sm:$0xff]
    %v86 = vld [vmem:[%s1 + $0x60] sm:$0xff]
    %v87 = vld [vmem:[%s1 + $0x68] sm:$0xff]
    %v88 = vld [vmem:[%s1 + $0x70] sm:$0xff]
    %v89 = vld [vmem:[%s1 + $0x78] sm:$0xff]
    %v90 = vld [vmem:[%s2] sm:$0x1]
    %v92 = vlaneseq
    %v93 = vshrl.u32 %v92, 7
    %v94 = vsub.s32 0, %v93
    %v95 = vrot.slane %v90, %v94
    %97 = vmatprep.subr.mxu0 0.0
    %98 = vmatpush1.msra.mxu0 %v74
    %99 = vmatprep.subr.mxu0 0.0
    %100 = vmatpush1.msra.mxu0 %v75
    %101 = vmatprep.subr.mxu0 0.0
    %102 = vmatpush1.msra.mxu0 %v76
    %103 = vmatprep.subr.mxu0 0.0
    %104 = vmatpush1.msra.mxu0 %v77
    %105 = vmatprep.subr.mxu0 0.0
    %106 = vmatpush1.msra.mxu0 %v78
    %107 = vmatprep.subr.mxu0 0.0
    %108 = vmatpush1.msra.mxu0 %v79
    %109 = vmatprep.subr.mxu0 0.0
    %110 = vmatpush1.msra.mxu0 %v80
    %111 = vmatprep.subr.mxu0 0.0
    %112 = vmatpush1.msra.mxu0 %v81
    %113 = vmatprep.subr.mxu0 0.0
    %114 = vmatpush1.msra.mxu0 %v82
    %115 = vmatprep.subr.mxu0 0.0
    %116 = vmatpush1.msra.mxu0 %v83
    %117 = vmatprep.subr.mxu0 0.0
    %118 = vmatpush1.msra.mxu0 %v84
    %119 = vmatprep.subr.mxu0 0.0
    %120 = vmatpush1.msra.mxu0 %v85
    %121 = vmatprep.subr.mxu0 0.0
    %122 = vmatpush1.msra.mxu0 %v86
    %123 = vmatprep.subr.mxu0 0.0
    %124 = vmatpush1.msra.mxu0 %v87
    %125 = vmatprep.subr.mxu0 0.0
    %126 = vmatpush1.msra.mxu0 %v88
    %127 = vmatprep.subr.mxu0 0.0
    %128 = vmatpush1.msra.mxu0 %v89
    %129 = vmatprep.subr.mxu0 0.0
    %130 = vmatpush1.msra.mxu0 0.0
    %131 = vmatprep.subr.mxu0 0.0
    %132 = vmatpush1.msra.mxu0 0.0
    %133 = vmatprep.subr.mxu0 0.0
    %134 = vmatpush1.msra.mxu0 0.0
    %135 = vmatprep.subr.mxu0 0.0
    %136 = vmatpush1.msra.mxu0 0.0
    %137 = vmatprep.subr.mxu0 0.0
    %138 = vmatpush1.msra.mxu0 0.0
    %139 = vmatprep.subr.mxu0 0.0
    %140 = vmatpush1.msra.mxu0 0.0
    %141 = vmatprep.subr.mxu0 0.0
    %142 = vmatpush1.msra.mxu0 0.0
    %143 = vmatprep.subr.mxu0 0.0
    %144 = vmatpush1.msra.mxu0 0.0
    %145 = vmatprep.subr.mxu0 0.0
    %146 = vmatpush1.msra.mxu0 0.0
    %147 = vmatprep.subr.mxu0 0.0
    %148 = vmatpush1.msra.mxu0 0.0
    %149 = vmatprep.subr.mxu0 0.0
    %150 = vmatpush1.msra.mxu0 0.0
    %151 = vmatprep.subr.mxu0 0.0
    %152 = vmatpush1.msra.mxu0 0.0
    %153 = vmatprep.subr.mxu0 0.0
    %154 = vmatpush1.msra.mxu0 0.0
    %155 = vmatprep.subr.mxu0 0.0
    %156 = vmatpush1.msra.mxu0 0.0
    %157 = vmatprep.subr.mxu0 0.0
    %158 = vmatpush1.msra.mxu0 0.0
    %159 = vmatprep.subr.mxu0 0.0
    %160 = vmatpush1.msra.mxu0 0.0
    %161 = vmatprep.mubr.f32.mxu0 0.0
    %162 = vmatmul.mubr.f32.gmra.mrb[0].mxu0 %v36
    %v163 = vpop.f32.mrb[0].mxu0
    %v164 = vadd.f32 %v95, %v163
    %v165 = vpop.f32.mrb[0].mxu0
    %166 = vmatprep.mubr.f32.mxu0 0.0
    %167 = vmatmul.mubr.f32.gmra.mrb[0].mxu0 %v37
    %v168 = vpop.f32.mrb[0].mxu0
    %v169 = vadd.f32 %v95, %v168
    %v170 = vpop.f32.mrb[0].mxu0
    %171 = vmatprep.mubr.f32.mxu0 0.0
    %172 = vmatmul.mubr.f32.gmra.mrb[0].mxu0 %v38
    %v173 = vpop.f32.mrb[0].mxu0
    %v174 = vadd.f32 %v95, %v173
    %v175 = vpop.f32.mrb[0].mxu0
    %176 = vmatprep.mubr.f32.mxu0 0.0
    %177 = vmatmul.mubr.f32.gmra.mrb[0].mxu0 %v39
    %v178 = vpop.f32.mrb[0].mxu0
    %v179 = vadd.f32 %v95, %v178
    %v180 = vpop.f32.mrb[0].mxu0
    %181 = vmatprep.mubr.f32.mxu0 0.0
    %182 = vmatmul.mubr.f32.gmra.mrb[0].mxu0 %v40
    %v183 = vpop.f32.mrb[0].mxu0
    %v184 = vadd.f32 %v95, %v183
    %v185 = vpop.f32.mrb[0].mxu0
    %186 = vmatprep.mubr.f32.mxu0 0.0
    %187 = vmatmul.mubr.f32.gmra.mrb[0].mxu0 %v41
    %v188 = vpop.f32.mrb[0].mxu0
    %v189 = vadd.f32 %v95, %v188
    %v190 = vpop.f32.mrb[0].mxu0
    %191 = vmatprep.mubr.f32.mxu0 0.0
    %192 = vmatmul.mubr.f32.gmra.mrb[0].mxu0 %v42
    %v193 = vpop.f32.mrb[0].mxu0
    %v194 = vadd.f32 %v95, %v193
    %v195 = vpop.f32.mrb[0].mxu0
    %196 = vmatprep.mubr.f32.mxu0 0.0
    %197 = vmatmul.mubr.f32.gmra.mrb[0].mxu0 %v43
    %v198 = vpop.f32.mrb[0].mxu0
    %v199 = vadd.f32 %v95, %v198
    %v200 = vpop.f32.mrb[0].mxu0
    %201 = vmatprep.mubr.f32.mxu0 0.0
    %202 = vmatmul.mubr.f32.gmra.mrb[0].mxu0 %v44
    %v203 = vpop.f32.mrb[0].mxu0
    %v204 = vadd.f32 %v95, %v203
    %v205 = vpop.f32.mrb[0].mxu0
    %206 = vmatprep.mubr.f32.mxu0 0.0
    %207 = vmatmul.mubr.f32.gmra.mrb[0].mxu0 %v45
    %v208 = vpop.f32.mrb[0].mxu0
    %v209 = vadd.f32 %v95, %v208
    %v210 = vpop.f32.mrb[0].mxu0
    %211 = vmatprep.mubr.f32.mxu0 0.0
    %212 = vmatmul.mubr.f32.gmra.mrb[0].mxu0 %v46
    %v213 = vpop.f32.mrb[0].mxu0
    %v214 = vadd.f32 %v95, %v213
    %v215 = vpop.f32.mrb[0].mxu0
    %216 = vmatprep.mubr.f32.mxu0 0.0
    %217 = vmatmul.mubr.f32.gmra.mrb[0].mxu0 %v47
    %v218 = vpop.f32.mrb[0].mxu0
    %v219 = vadd.f32 %v95, %v218
    %v220 = vpop.f32.mrb[0].mxu0
    %221 = vmatprep.mubr.f32.mxu0 0.0
    %222 = vmatmul.mubr.f32.gmra.mrb[0].mxu0 %v48
    %v223 = vpop.f32.mrb[0].mxu0
    %v224 = vadd.f32 %v95, %v223
    %v225 = vpop.f32.mrb[0].mxu0
    %226 = vmatprep.mubr.f32.mxu0 0.0
    %227 = vmatmul.mubr.f32.gmra.mrb[0].mxu0 %v49
    %v228 = vpop.f32.mrb[0].mxu0
    %v229 = vadd.f32 %v95, %v228
    %v230 = vpop.f32.mrb[0].mxu0
    %231 = vmatprep.mubr.f32.mxu0 0.0
    %232 = vmatmul.mubr.f32.gmra.mrb[0].mxu0 %v50
    %v233 = vpop.f32.mrb[0].mxu0
    %v234 = vadd.f32 %v95, %v233
    %v235 = vpop.f32.mrb[0].mxu0
    %236 = vmatprep.mubr.f32.mxu0 0.0
    %237 = vmatmul.mubr.f32.gmra.mrb[0].mxu0 %v51
    %v238 = vpop.f32.mrb[0].mxu0
    %v239 = vadd.f32 %v95, %v238
    %v240 = vpop.f32.mrb[0].mxu0
    %241 = vmatprep.mubr.f32.mxu0 0.0
    %242 = vmatmul.mubr.f32.gmra.mrb[0].mxu0 %v52
    %v243 = vpop.f32.mrb[0].mxu0
    %v244 = vadd.f32 %v95, %v243
    %v245 = vpop.f32.mrb[0].mxu0
    %246 = vmatprep.mubr.f32.mxu0 0.0
    %247 = vmatmul.mubr.f32.gmra.mrb[0].mxu0 %v53
    %v248 = vpop.f32.mrb[0].mxu0
    %v249 = vadd.f32 %v95, %v248
    %v250 = vpop.f32.mrb[0].mxu0
    %251 = vmatprep.mubr.f32.mxu0 0.0
    %252 = vmatmul.mubr.f32.gmra.mrb[0].mxu0 %v54
    %v253 = vpop.f32.mrb[0].mxu0
    %v254 = vadd.f32 %v95, %v253
    %v255 = vpop.f32.mrb[0].mxu0
    %256 = vmatprep.mubr.f32.mxu0 0.0
    %257 = vmatmul.mubr.f32.gmra.mrb[0].mxu0 %v55
    %v258 = vpop.f32.mrb[0].mxu0
    %v259 = vadd.f32 %v95, %v258
    %v260 = vpop.f32.mrb[0].mxu0
    %261 = vmatprep.mubr.f32.mxu0 0.0
    %262 = vmatmul.mubr.f32.gmra.mrb[0].mxu0 %v56
    %v263 = vpop.f32.mrb[0].mxu0
    %v264 = vadd.f32 %v95, %v263
    %v265 = vpop.f32.mrb[0].mxu0
    %266 = vmatprep.mubr.f32.mxu0 0.0
    %267 = vmatmul.mubr.f32.gmra.mrb[0].mxu0 %v57
    %v268 = vpop.f32.mrb[0].mxu0
    %v269 = vadd.f32 %v95, %v268
    %v270 = vpop.f32.mrb[0].mxu0
    %271 = vmatprep.mubr.f32.mxu0 0.0
    %272 = vmatmul.mubr.f32.gmra.mrb[0].mxu0 %v58
    %v273 = vpop.f32.mrb[0].mxu0
    %v274 = vadd.f32 %v95, %v273
    %v275 = vpop.f32.mrb[0].mxu0
    %276 = vmatprep.mubr.f32.mxu0 0.0
    %277 = vmatmul.mubr.f32.gmra.mrb[0].mxu0 %v59
    %v278 = vpop.f32.mrb[0].mxu0
    %v279 = vadd.f32 %v95, %v278
    %v280 = vpop.f32.mrb[0].mxu0
    %281 = vmatprep.mubr.f32.mxu0 0.0
    %282 = vmatmul.mubr.f32.gmra.mrb[0].mxu0 %v60
    %v283 = vpop.f32.mrb[0].mxu0
    %v284 = vadd.f32 %v95, %v283
    %v285 = vpop.f32.mrb[0].mxu0
    %286 = vmatprep.mubr.f32.mxu0 0.0
    %287 = vmatmul.mubr.f32.gmra.mrb[0].mxu0 %v61
    %v288 = vpop.f32.mrb[0].mxu0
    %v289 = vadd.f32 %v95, %v288
    %v290 = vpop.f32.mrb[0].mxu0
    %291 = vmatprep.mubr.f32.mxu0 0.0
    %292 = vmatmul.mubr.f32.gmra.mrb[0].mxu0 %v62
    %v293 = vpop.f32.mrb[0].mxu0
    %v294 = vadd.f32 %v95, %v293
    %v295 = vpop.f32.mrb[0].mxu0
    %296 = vmatprep.mubr.f32.mxu0 0.0
    %297 = vmatmul.mubr.f32.gmra.mrb[0].mxu0 %v63
    %v298 = vpop.f32.mrb[0].mxu0
    %v299 = vadd.f32 %v95, %v298
    %v300 = vpop.f32.mrb[0].mxu0
    %301 = vmatprep.mubr.f32.mxu0 0.0
    %302 = vmatmul.mubr.f32.gmra.mrb[0].mxu0 %v64
    %v303 = vpop.f32.mrb[0].mxu0
    %v304 = vadd.f32 %v95, %v303
    %v305 = vpop.f32.mrb[0].mxu0
    %306 = vmatprep.mubr.f32.mxu0 0.0
    %307 = vmatmul.mubr.f32.gmra.mrb[0].mxu0 %v65
    %v308 = vpop.f32.mrb[0].mxu0
    %v309 = vadd.f32 %v95, %v308
    %v310 = vpop.f32.mrb[0].mxu0
    %311 = vmatprep.mubr.f32.mxu0 0.0
    %312 = vmatmul.mubr.f32.gmra.mrb[0].mxu0 %v66
    %v313 = vpop.f32.mrb[0].mxu0
    %v314 = vadd.f32 %v95, %v313
    %v315 = vpop.f32.mrb[0].mxu0
    %316 = vmatprep.mubr.f32.mxu0 0.0
    %317 = vmatmul.mubr.f32.gmra.mrb[0].mxu0 %v67
    %v318 = vpop.f32.mrb[0].mxu0
    %v319 = vadd.f32 %v95, %v318
    %v320 = vpop.f32.mrb[0].mxu0
    %321 = vmatprep.mubr.f32.mxu0 0.0
    %322 = vmatmul.mubr.f32.gmra.mrb[0].mxu0 %v68
    %v323 = vpop.f32.mrb[0].mxu0
    %v324 = vadd.f32 %v95, %v323
    %v325 = vpop.f32.mrb[0].mxu0
    %326 = vmatprep.mubr.f32.mxu0 0.0
    %327 = vmatmul.mubr.f32.gmra.mrb[0].mxu0 %v69
    %v328 = vpop.f32.mrb[0].mxu0
    %v329 = vadd.f32 %v95, %v328
    %v330 = vpop.f32.mrb[0].mxu0
    %331 = vmatprep.mubr.f32.mxu0 0.0
    %332 = vmatmul.mubr.f32.gmra.mrb[0].mxu0 %v70
    %v333 = vpop.f32.mrb[0].mxu0
    %v334 = vadd.f32 %v95, %v333
    %v335 = vpop.f32.mrb[0].mxu0
    %336 = vmatprep.mubr.f32.mxu0 0.0
    %337 = vmatmul.mubr.f32.gmra.mrb[0].mxu0 %v71
    %v338 = vpop.f32.mrb[0].mxu0
    %v339 = vadd.f32 %v95, %v338
    %v340 = vpop.f32.mrb[0].mxu0
    %341 = vmatprep.mubr.f32.mxu0 0.0
    %342 = vmatmul.mubr.f32.gmra.mrb[0].mxu0 %v72
    %v343 = vpop.f32.mrb[0].mxu0
    %v344 = vadd.f32 %v95, %v343
    %v345 = vpop.f32.mrb[0].mxu0
    %346 = vmatprep.mubr.f32.mxu0 0.0
    %347 = vmatmul.mubr.f32.gmra.mrb[0].mxu0 %v73
    %v348 = vpop.f32.mrb[0].mxu0
    %v349 = vadd.f32 %v95, %v348
    %v350 = vpop.f32.mrb[0].mxu0
    %351 = vdwg.mxu0
    %v352 = vtanh.pop %v164
    %v353 = vtanh.pop %v169
    %v354 = vtanh.pop %v174
    %v355 = vtanh.pop %v179
    %v356 = vtanh.pop %v184
    %v357 = vtanh.pop %v189
    %v358 = vtanh.pop %v194
    %v359 = vtanh.pop %v199
    %v360 = vtanh.pop %v204
    %v361 = vtanh.pop %v209
    %v362 = vtanh.pop %v214
    %v363 = vtanh.pop %v219
    %v364 = vtanh.pop %v224
    %v365 = vtanh.pop %v229
    %v366 = vtanh.pop %v234
    %v367 = vtanh.pop %v239
    %v368 = vtanh.pop %v244
    %v369 = vtanh.pop %v249
    %v370 = vtanh.pop %v254
    %v371 = vtanh.pop %v259
    %v372 = vtanh.pop %v264
    %v373 = vtanh.pop %v269
    %v374 = vtanh.pop %v274
    %v375 = vtanh.pop %v279
    %v376 = vtanh.pop %v284
    %v377 = vtanh.pop %v289
    %v378 = vtanh.pop %v294
    %v379 = vtanh.pop %v299
    %v380 = vtanh.pop %v304
    %v381 = vtanh.pop %v309
    %v382 = vtanh.pop %v314
    %v383 = vtanh.pop %v319
    %v384 = vtanh.pop %v324
    %v385 = vtanh.pop %v329
    %v386 = vtanh.pop %v334
    %v387 = vtanh.pop %v339
    %v388 = vtanh.pop %v344
    %v389 = vtanh.pop %v349
    %v390 = vld [vmem:[%s3] sm:$0x1]
    %v392 = vlaneseq
    %v393 = vshrl.u32 %v392, 7
    %v394 = vsub.s32 0, %v393
    %v395 = vrot.slane %v390, %v394
    %v397 = vmul.f32 %v352, %v395
    %v398 = vmul.f32 %v353, %v395
    %v399 = vmul.f32 %v354, %v395
    %v400 = vmul.f32 %v355, %v395
    %v401 = vmul.f32 %v356, %v395
    %v402 = vmul.f32 %v357, %v395
    %v403 = vmul.f32 %v358, %v395
    %v404 = vmul.f32 %v359, %v395
    %v405 = vmul.f32 %v360, %v395
    %v406 = vmul.f32 %v361, %v395
    %v407 = vmul.f32 %v362, %v395
    %v408 = vmul.f32 %v363, %v395
    %v409 = vmul.f32 %v364, %v395
    %v410 = vmul.f32 %v365, %v395
    %v411 = vmul.f32 %v366, %v395
    %v412 = vmul.f32 %v367, %v395
    %v413 = vmul.f32 %v368, %v395
    %v414 = vmul.f32 %v369, %v395
    %v415 = vmul.f32 %v370, %v395
    %v416 = vmul.f32 %v371, %v395
    %v417 = vmul.f32 %v372, %v395
    %v418 = vmul.f32 %v373, %v395
    %v419 = vmul.f32 %v374, %v395
    %v420 = vmul.f32 %v375, %v395
    %v421 = vmul.f32 %v376, %v395
    %v422 = vmul.f32 %v377, %v395
    %v423 = vmul.f32 %v378, %v395
    %v424 = vmul.f32 %v379, %v395
    %v425 = vmul.f32 %v380, %v395
    %v426 = vmul.f32 %v381, %v395
    %v427 = vmul.f32 %v382, %v395
    %v428 = vmul.f32 %v383, %v395
    %v429 = vmul.f32 %v384, %v395
    %v430 = vmul.f32 %v385, %v395
    %v431 = vmul.f32 %v386, %v395
    %v432 = vmul.f32 %v387, %v395
    %v433 = vmul.f32 %v388, %v395
    %v434 = vmul.f32 %v389, %v395
    %vm435 = vcmask 523264
    %v436 = vsel %vm435, %v397, 0.0
    %437 = vadd.xlane.f32.xlu0 %v436
    %v438 = vpop.xlane.xlu0 %437
    %v439 = vsel %vm435, %v398, 0.0
    %440 = vadd.xlane.f32.xlu0 %v439
    %v441 = vpop.xlane.xlu0 %440
    %v442 = vsel %vm435, %v399, 0.0
    %443 = vadd.xlane.f32.xlu0 %v442
    %v444 = vpop.xlane.xlu0 %443
    %v445 = vsel %vm435, %v400, 0.0
    %446 = vadd.xlane.f32.xlu0 %v445
    %v447 = vpop.xlane.xlu0 %446
    %v448 = vsel %vm435, %v401, 0.0
    %449 = vadd.xlane.f32.xlu0 %v448
    %v450 = vpop.xlane.xlu0 %449
    %v451 = vsel %vm435, %v402, 0.0
    %452 = vadd.xlane.f32.xlu0 %v451
    %v453 = vpop.xlane.xlu0 %452
    %v454 = vsel %vm435, %v403, 0.0
    %455 = vadd.xlane.f32.xlu0 %v454
    %v456 = vpop.xlane.xlu0 %455
    %v457 = vsel %vm435, %v404, 0.0
    %458 = vadd.xlane.f32.xlu0 %v457
    %v459 = vpop.xlane.xlu0 %458
    %v460 = vsel %vm435, %v405, 0.0
    %461 = vadd.xlane.f32.xlu0 %v460
    %v462 = vpop.xlane.xlu0 %461
    %v463 = vsel %vm435, %v406, 0.0
    %464 = vadd.xlane.f32.xlu0 %v463
    %v465 = vpop.xlane.xlu0 %464
    %v466 = vsel %vm435, %v407, 0.0
    %467 = vadd.xlane.f32.xlu0 %v466
    %v468 = vpop.xlane.xlu0 %467
    %v469 = vsel %vm435, %v408, 0.0
    %470 = vadd.xlane.f32.xlu0 %v469
    %v471 = vpop.xlane.xlu0 %470
    %v472 = vsel %vm435, %v409, 0.0
    %473 = vadd.xlane.f32.xlu0 %v472
    %v474 = vpop.xlane.xlu0 %473
    %v475 = vsel %vm435, %v410, 0.0
    %476 = vadd.xlane.f32.xlu0 %v475
    %v477 = vpop.xlane.xlu0 %476
    %v478 = vsel %vm435, %v411, 0.0
    %479 = vadd.xlane.f32.xlu0 %v478
    %v480 = vpop.xlane.xlu0 %479
    %v481 = vsel %vm435, %v412, 0.0
    %482 = vadd.xlane.f32.xlu0 %v481
    %v483 = vpop.xlane.xlu0 %482
    %v484 = vsel %vm435, %v413, 0.0
    %485 = vadd.xlane.f32.xlu0 %v484
    %v486 = vpop.xlane.xlu0 %485
    %v487 = vsel %vm435, %v414, 0.0
    %488 = vadd.xlane.f32.xlu0 %v487
    %v489 = vpop.xlane.xlu0 %488
    %v490 = vsel %vm435, %v415, 0.0
    %491 = vadd.xlane.f32.xlu0 %v490
    %v492 = vpop.xlane.xlu0 %491
    %v493 = vsel %vm435, %v416, 0.0
    %494 = vadd.xlane.f32.xlu0 %v493
    %v495 = vpop.xlane.xlu0 %494
    %v496 = vsel %vm435, %v417, 0.0
    %497 = vadd.xlane.f32.xlu0 %v496
    %v498 = vpop.xlane.xlu0 %497
    %v499 = vsel %vm435, %v418, 0.0
    %500 = vadd.xlane.f32.xlu0 %v499
    %v501 = vpop.xlane.xlu0 %500
    %v502 = vsel %vm435, %v419, 0.0
    %503 = vadd.xlane.f32.xlu0 %v502
    %v504 = vpop.xlane.xlu0 %503
    %v505 = vsel %vm435, %v420, 0.0
    %506 = vadd.xlane.f32.xlu0 %v505
    %v507 = vpop.xlane.xlu0 %506
    %v508 = vsel %vm435, %v421, 0.0
    %509 = vadd.xlane.f32.xlu0 %v508
    %v510 = vpop.xlane.xlu0 %509
    %v511 = vsel %vm435, %v422, 0.0
    %512 = vadd.xlane.f32.xlu0 %v511
    %v513 = vpop.xlane.xlu0 %512
    %v514 = vsel %vm435, %v423, 0.0
    %515 = vadd.xlane.f32.xlu0 %v514
    %v516 = vpop.xlane.xlu0 %515
    %v517 = vsel %vm435, %v424, 0.0
    %518 = vadd.xlane.f32.xlu0 %v517
    %v519 = vpop.xlane.xlu0 %518
    %v520 = vsel %vm435, %v425, 0.0
    %521 = vadd.xlane.f32.xlu0 %v520
    %v522 = vpop.xlane.xlu0 %521
    %v523 = vsel %vm435, %v426, 0.0
    %524 = vadd.xlane.f32.xlu0 %v523
    %v525 = vpop.xlane.xlu0 %524
    %v526 = vsel %vm435, %v427, 0.0
    %527 = vadd.xlane.f32.xlu0 %v526
    %v528 = vpop.xlane.xlu0 %527
    %v529 = vsel %vm435, %v428, 0.0
    %530 = vadd.xlane.f32.xlu0 %v529
    %v531 = vpop.xlane.xlu0 %530
    %v532 = vsel %vm435, %v429, 0.0
    %533 = vadd.xlane.f32.xlu0 %v532
    %v534 = vpop.xlane.xlu0 %533
    %v535 = vsel %vm435, %v430, 0.0
    %536 = vadd.xlane.f32.xlu0 %v535
    %v537 = vpop.xlane.xlu0 %536
    %v538 = vsel %vm435, %v431, 0.0
    %539 = vadd.xlane.f32.xlu0 %v538
    %v540 = vpop.xlane.xlu0 %539
    %v541 = vsel %vm435, %v432, 0.0
    %542 = vadd.xlane.f32.xlu0 %v541
    %v543 = vpop.xlane.xlu0 %542
    %v544 = vsel %vm435, %v433, 0.0
    %545 = vadd.xlane.f32.xlu0 %v544
    %v546 = vpop.xlane.xlu0 %545
    %vm547 = vcmask 519168
    %v548 = vsel %vm547, %v434, 0.0
    %549 = vadd.xlane.f32.xlu0 %v548
    %v550 = vpop.xlane.xlu0 %549
    %v551 = vld [vmem:[#allocation2] sm:$0x1]
    %v553 = vlaneseq
    %v554 = vshrl.u32 %v553, 7
    %v555 = vsub.s32 0, %v554
    %v556 = vrot.slane %v551, %v555
    %v558 = vadd.f32 %v438, %v556
    %v559 = vadd.f32 %v441, %v556
    %v560 = vadd.f32 %v444, %v556
    %v561 = vadd.f32 %v447, %v556
    %v562 = vadd.f32 %v450, %v556
    %v563 = vadd.f32 %v453, %v556
    %v564 = vadd.f32 %v456, %v556
    %v565 = vadd.f32 %v459, %v556
    %v566 = vadd.f32 %v462, %v556
    %v567 = vadd.f32 %v465, %v556
    %v568 = vadd.f32 %v468, %v556
    %v569 = vadd.f32 %v471, %v556
    %v570 = vadd.f32 %v474, %v556
    %v571 = vadd.f32 %v477, %v556
    %v572 = vadd.f32 %v480, %v556
    %v573 = vadd.f32 %v483, %v556
    %v574 = vadd.f32 %v486, %v556
    %v575 = vadd.f32 %v489, %v556
    %v576 = vadd.f32 %v492, %v556
    %v577 = vadd.f32 %v495, %v556
    %v578 = vadd.f32 %v498, %v556
    %v579 = vadd.f32 %v501, %v556
    %v580 = vadd.f32 %v504, %v556
    %v581 = vadd.f32 %v507, %v556
    %v582 = vadd.f32 %v510, %v556
    %v583 = vadd.f32 %v513, %v556
    %v584 = vadd.f32 %v516, %v556
    %v585 = vadd.f32 %v519, %v556
    %v586 = vadd.f32 %v522, %v556
    %v587 = vadd.f32 %v525, %v556
    %v588 = vadd.f32 %v528, %v556
    %v589 = vadd.f32 %v531, %v556
    %v590 = vadd.f32 %v534, %v556
    %v591 = vadd.f32 %v537, %v556
    %v592 = vadd.f32 %v540, %v556
    %v593 = vadd.f32 %v543, %v556
    %v594 = vadd.f32 %v546, %v556
    %v595 = vadd.f32 %v550, %v556
    %vm596 = vcmask 7168
    %597 = vst.msk [vmem:[%s5] sm:$0xff] %vm596, %v558
    %598 = vst.msk [vmem:[%s5 + $0x8] sm:$0xff] %vm596, %v559
    %599 = vst.msk [vmem:[%s5 + $0x10] sm:$0xff] %vm596, %v560
    %600 = vst.msk [vmem:[%s5 + $0x18] sm:$0xff] %vm596, %v561
    %601 = vst.msk [vmem:[%s5 + $0x20] sm:$0xff] %vm596, %v562
    %602 = vst.msk [vmem:[%s5 + $0x28] sm:$0xff] %vm596, %v563
    %603 = vst.msk [vmem:[%s5 + $0x30] sm:$0xff] %vm596, %v564
    %604 = vst.msk [vmem:[%s5 + $0x38] sm:$0xff] %vm596, %v565
    %605 = vst.msk [vmem:[%s5 + $0x40] sm:$0xff] %vm596, %v566
    %606 = vst.msk [vmem:[%s5 + $0x48] sm:$0xff] %vm596, %v567
    %607 = vst.msk [vmem:[%s5 + $0x50] sm:$0xff] %vm596, %v568
    %608 = vst.msk [vmem:[%s5 + $0x58] sm:$0xff] %vm596, %v569
    %609 = vst.msk [vmem:[%s5 + $0x60] sm:$0xff] %vm596, %v570
    %610 = vst.msk [vmem:[%s5 + $0x68] sm:$0xff] %vm596, %v571
    %611 = vst.msk [vmem:[%s5 + $0x70] sm:$0xff] %vm596, %v572
    %612 = vst.msk [vmem:[%s5 + $0x78] sm:$0xff] %vm596, %v573
    %613 = vst.msk [vmem:[%s5 + $0x80] sm:$0xff] %vm596, %v574
    %614 = vst.msk [vmem:[%s5 + $0x88] sm:$0xff] %vm596, %v575
    %615 = vst.msk [vmem:[%s5 + $0x90] sm:$0xff] %vm596, %v576
    %616 = vst.msk [vmem:[%s5 + $0x98] sm:$0xff] %vm596, %v577
    %617 = vst.msk [vmem:[%s5 + $0xa0] sm:$0xff] %vm596, %v578
    %618 = vst.msk [vmem:[%s5 + $0xa8] sm:$0xff] %vm596, %v579
    %619 = vst.msk [vmem:[%s5 + $0xb0] sm:$0xff] %vm596, %v580
    %620 = vst.msk [vmem:[%s5 + $0xb8] sm:$0xff] %vm596, %v581
    %621 = vst.msk [vmem:[%s5 + $0xc0] sm:$0xff] %vm596, %v582
    %622 = vst.msk [vmem:[%s5 + $0xc8] sm:$0xff] %vm596, %v583
    %623 = vst.msk [vmem:[%s5 + $0xd0] sm:$0xff] %vm596, %v584
    %624 = vst.msk [vmem:[%s5 + $0xd8] sm:$0xff] %vm596, %v585
    %625 = vst.msk [vmem:[%s5 + $0xe0] sm:$0xff] %vm596, %v586
    %626 = vst.msk [vmem:[%s5 + $0xe8] sm:$0xff] %vm596, %v587
    %627 = vst.msk [vmem:[%s5 + $0xf0] sm:$0xff] %vm596, %v588
    %628 = vst.msk [vmem:[%s5 + $0xf8] sm:$0xff] %vm596, %v589
    %629 = vst.msk [vmem:[%s5 + $0x100] sm:$0xff] %vm596, %v590
    %630 = vst.msk [vmem:[%s5 + $0x108] sm:$0xff] %vm596, %v591
    %631 = vst.msk [vmem:[%s5 + $0x110] sm:$0xff] %vm596, %v592
    %632 = vst.msk [vmem:[%s5 + $0x118] sm:$0xff] %vm596, %v593
    %633 = vst.msk [vmem:[%s5 + $0x120] sm:$0xff] %vm596, %v594
    %vm634 = vcmask 3072
    %635 = vst.msk [vmem:[%s5 + $0x128] sm:$0xf] %vm634, %v595
    // Predicated region
    $region26: #{tpu_custom_call.1} parent=1 // pred_check
      _
    $region27: #{tpu_custom_call.1} parent=1 // pred_check_branch
      %637 = sbr.rel (0) target = $region29
    $region28: #{tpu_custom_call.1} parent=1 // pred_region
      _
    $region29: #{tpu_custom_call.1} parent=1 // pred_fallthru
      _
    // Predicated region
    $region30: #{tpu_custom_call.1} parent=1 // pred_check
      _
    $region31: #{tpu_custom_call.1} parent=1 // pred_check_branch
      %639 = sbr.rel (0) target = $region33
    $region32: #{tpu_custom_call.1} parent=1 // pred_region
      _
    $region33: #{tpu_custom_call.1} parent=1 // pred_fallthru
      _
    %640 = vsyncpa [#allocation4], 1

</llo_original>
